<compile_context>
chip_gen: v6e
topology: v6e:2x2x1
jax: 0.10.0
libtpu: 0.0.40
codegen_flags: <defaults>
</compile_context>

<pallas_src>
import functools
import math

import numpy as np
import jax
import jax.numpy as jnp
from jax.experimental import pallas as pl
from jax.experimental.pallas import tpu as pltpu


def make_scale_bias(size: int, expected_rate: int):
    """Deterministic parameter setup matching the PyTorch __init__."""
    assert size % 2 == 0
    k = size // 2
    nyquist_frequency = expected_rate / 2
    golden_ratio = (1 + np.sqrt(5)) / 2
    frequencies = np.geomspace(1 / 8, nyquist_frequency / (2 * golden_ratio), num=k)
    scale = np.repeat(2 * np.pi * frequencies, 2).astype(np.float32)   # (size,)
    bias = np.tile(np.array([0.0, np.pi / 2]), k).astype(np.float32)   # (size,)
    return jnp.asarray(scale), jnp.asarray(bias)


def _round_up(x: int, m: int) -> int:
    return (x + m - 1) // m * m


def _cdiv(a: int, b: int) -> int:
    return -(-a // b)


def _choose_tile_rows(n_rows: int, lane_width: int, *,
                      max_tile_bytes: int = 4 << 20, min_blocks: int = 2) -> int:
    """Largest 8-aligned row tile with <= max_tile_bytes output bytes, but small
    enough that the grid still has >= min_blocks steps when there is enough work
    (keeps both v7x TensorCores busy)."""
    bytes_per_row = _round_up(lane_width, 128) * 4
    cap = max(8, (max_tile_bytes // bytes_per_row) // 8 * 8)
    per_block = _round_up(_cdiv(n_rows, min_blocks), 8)
    return max(8, min(cap, per_block))


def _nyquist_kernel(t_ref, ssel_ref, bias_ref, o_ref, *, pack):
    # t_ref:    (tile_rows, pack)        float32
    # ssel_ref: (pack, lane_width)       float32  (scale folded into 0/1 selector)
    #           (for pack == 1 it is simply the (1, lane_width) scale row)
    # bias_ref: (1, lane_width)          float32
    # o_ref:    (tile_rows, lane_width)  out dtype
    t = t_ref[...]
    if pack == 1:
        # (tile_rows, 1) * (1, lane_width) broadcast on the VPU.
        phase = t * ssel_ref[...]
    else:
        # Lane expansion + scale multiply in one MXU matmul (MXU is idle anyway).
        phase = jnp.dot(t, ssel_ref[...],
                        preferred_element_type=jnp.float32,
                        precision=jax.lax.Precision.HIGHEST)
    # TODO(synk): if v7x profiling shows the sin polynomial binds the VALU slot,
    # replace jnp.sin with a bounded-range fused sincos (args are bias + scale*t
    # with t in [0,1], bias in {0, pi/2}); no clean EUP path exists for sin.
    o_ref[...] = jnp.sin(bias_ref[...] + phase).astype(o_ref.dtype)


def nyquist_positional_embedding(t: jax.Array, scale: jax.Array, bias: jax.Array,
                                 *, out_dtype=jnp.float32,
                                 max_lane_width: int = 1024,
                                 max_tile_bytes: int = 4 << 20) -> jax.Array:
    """Compute sin(bias + scale * t[..., None]) with a Pallas TPU kernel."""
    size = int(scale.shape[0])
    batch_shape = t.shape
    n = int(np.prod(batch_shape)) if batch_shape else 1
    if n == 0:
        return jnp.zeros((*batch_shape, size), dtype=out_dtype)

    t_flat = jnp.reshape(t.astype(jnp.float32), (n,))

    # Lane-dense packing: each output row of width lane_width holds `pack`
    # consecutive size-wide embeddings (row-major bytes are identical).
    lcm = size * 128 // math.gcd(size, 128)
    if lcm <= max(max_lane_width, size):
        lane_width = lcm
        pack = lane_width // size        # always a power of two (128 / gcd)
    else:
        lane_width = size                # rare fallback: masked partial stores
        pack = 1

    if pack > 1:
        rem = (-n) % pack
        if rem:
            t_flat = jnp.pad(t_flat, (0, rem))         # < pack elements of pad
        n_rows = (n + rem) // pack
        lane_idx = np.arange(lane_width)
        sel = (lane_idx[None, :] // size) == np.arange(pack)[:, None]  # (pack, L)
        scale_tiled = jnp.tile(scale.astype(jnp.float32), pack)        # (L,)
        ssel = jnp.where(jnp.asarray(sel), scale_tiled[None, :],
                         jnp.zeros((), jnp.float32))                   # (pack, L)
        bias_row = jnp.reshape(jnp.tile(bias.astype(jnp.float32), pack),
                               (1, lane_width))
    else:
        n_rows = n
        ssel = jnp.reshape(scale.astype(jnp.float32), (1, lane_width))
        bias_row = jnp.reshape(bias.astype(jnp.float32), (1, lane_width))

    t2d = jnp.reshape(t_flat, (n_rows, pack))

    tile_rows = _choose_tile_rows(n_rows, lane_width, max_tile_bytes=max_tile_bytes)
    grid = (pl.cdiv(n_rows, tile_rows),)

    # VMEM budget: double-buffered output + lane-padded t tile + tiny residents.
    out_tile_bytes = tile_rows * _round_up(lane_width, 128) * 4
    t_tile_bytes = tile_rows * 128 * 4                 # lane-padded in VMEM
    resident_bytes = (pack + 1) * _round_up(lane_width, 128) * 4
    est_vmem = 2 * (out_tile_bytes + t_tile_bytes) + 2 * resident_bytes
    vmem_limit = int(min(48 << 20, max(32 << 20, 2 * est_vmem)))

    out_elem_bytes = jnp.dtype(out_dtype).itemsize
    cost = pl.CostEstimate(
        flops=2 * n_rows * pack * lane_width + 2 * n * size,
        transcendentals=n * size,
        bytes_accessed=out_elem_bytes * n * size + 4 * n + resident_bytes,
    )

    kernel = functools.partial(_nyquist_kernel, pack=pack)

    out = pl.pallas_call(
        kernel,
        out_shape=jax.ShapeDtypeStruct((n_rows, lane_width), out_dtype),
        grid_spec=pltpu.PrefetchScalarGridSpec(
            num_scalar_prefetch=0,
            grid=grid,
            in_specs=[
                pl.BlockSpec((tile_rows, pack), lambda i: (i, 0)),        # t rows
                pl.BlockSpec((pack, lane_width), lambda i: (0, 0)),       # scale-selector (resident)
                pl.BlockSpec((1, lane_width), lambda i: (0, 0)),          # bias (resident)
            ],
            out_specs=pl.BlockSpec((tile_rows, lane_width), lambda i: (i, 0)),
        ),
        compiler_params=pltpu.CompilerParams(
            dimension_semantics=("parallel",),
            vmem_limit_bytes=vmem_limit,
        ),
        cost_estimate=cost,
    )(t2d, ssel, bias_row)

    # Row-major bytes of (n_rows, lane_width) == (n_rows*pack, size): free reshape.
    out_flat = jnp.reshape(out, (n_rows * pack, size))
    if n_rows * pack != n:                             # only when pack-padding happened
        out_flat = out_flat[:n]
    return jnp.reshape(out_flat, (*batch_shape, size))


if __name__ == "__main__":
    key = jax.random.PRNGKey(0)
    # batch of timesteps in [0, 1], shape (2, 8)
    t = jax.random.uniform(key, (2, 8), dtype=jnp.float32)

    # packed (size=32 -> lane 128, pack 4), lcm-packed (size=48 -> lane 384,
    # pack 8), and direct (size=128 -> lane 128, pack 1) paths.
    for size in (32, 48, 128):
        scale, bias = make_scale_bias(size, expected_rate=10)
        out = jax.block_until_ready(nyquist_positional_embedding(t, scale, bias))
        ref = jnp.sin(bias + scale * t[..., None])
        assert out.shape == (2, 8, size), (size, out.shape)
        assert jnp.allclose(out, ref, atol=1e-5, rtol=1e-5), f"mismatch size={size}"

    # ragged case: n % pack != 0 exercises the tiny pad + tail-slice path.
    t2 = jax.random.uniform(jax.random.PRNGKey(1), (3, 5), dtype=jnp.float32)
    scale, bias = make_scale_bias(32, expected_rate=10)
    out2 = jax.block_until_ready(nyquist_positional_embedding(t2, scale, bias))
    ref2 = jnp.sin(bias + scale * t2[..., None])
    assert out2.shape == (3, 5, 32), out2.shape
    assert jnp.allclose(out2, ref2, atol=1e-5, rtol=1e-5), "ragged path mismatch"

    print("KERNEL_OK")
</pallas_src>

<mosaic_0001>
module attributes {stable_mosaic.version = 11 : i64} {
  func.func @_nyquist_kernel(%arg0: i32, %arg1: memref<8x4xf32, #tpu.memory_space<vmem>>, %arg2: memref<4x128xf32, #tpu.memory_space<vmem>>, %arg3: memref<1x128xf32, #tpu.memory_space<vmem>>, %arg4: memref<8x128xf32, #tpu.memory_space<vmem>>) attributes {dimension_semantics = [#tpu.dimension_semantics<parallel>], iteration_bounds = array<i64: 1>, scalar_prefetch = 0 : i64, scratch_operands = 0 : i64, tpu.core_type = #tpu.core_type<tc>, window_params = [{transform_indices = @transform_0, window_bounds = array<i64: 8, 4>}, {pipeline_mode = #tpu.pipeline_mode<synchronous>, transform_indices = @transform_1, window_bounds = array<i64: 4, 128>}, {pipeline_mode = #tpu.pipeline_mode<synchronous>, transform_indices = @transform_2, window_bounds = array<i64: 1, 128>}, {transform_indices = @transform_3, window_bounds = array<i64: 8, 128>}]} {
    %c0 = arith.constant 0 : index
    %c0_0 = arith.constant 0 : index
    %0 = vector.load %arg1[%c0, %c0_0] : memref<8x4xf32, #tpu.memory_space<vmem>>, vector<8x4xf32>
    %c0_1 = arith.constant 0 : index
    %c0_2 = arith.constant 0 : index
    %1 = vector.load %arg2[%c0_1, %c0_2] : memref<4x128xf32, #tpu.memory_space<vmem>>, vector<4x128xf32>
    %cst = arith.constant dense<0.000000e+00> : vector<8x128xf32>
    %2 = tpu.matmul %0, %1, %cst {dimension_numbers = #tpu.dot_dimension_numbers<[1], [0], [0], [1], [0, 0, 1, 1], [], []>, precision = #tpu.contract_precision<fp32>} : vector<8x4xf32>, vector<4x128xf32>, vector<8x128xf32> -> vector<8x128xf32>
    %c0_3 = arith.constant 0 : index
    %c0_4 = arith.constant 0 : index
    %3 = vector.load %arg3[%c0_3, %c0_4] : memref<1x128xf32, #tpu.memory_space<vmem>>, vector<1x128xf32>
    %4 = vector.broadcast %3 : vector<1x128xf32> to vector<8x128xf32>
    %5 = arith.addf %4, %2 : vector<8x128xf32>
    %6 = math.sin %5 : vector<8x128xf32>
    %c0_5 = arith.constant 0 : index
    %c0_6 = arith.constant 0 : index
    %7 = vector.load %arg4[%c0_5, %c0_6] : memref<8x128xf32, #tpu.memory_space<vmem>>, vector<8x128xf32>
    tpu.vector_store %arg4[%c0_5, %c0_6], %6 {strides = array<i32>} : memref<8x128xf32, #tpu.memory_space<vmem>>, vector<8x128xf32>,
    return
  }
  func.func @transform_0(%arg0: i32) -> (i32, i32) {
    %c0_i32 = arith.constant 0 : i32
    %c0_i32_0 = arith.constant 0 : i32
    return %arg0, %c0_i32 : i32, i32
  }
  func.func @transform_1(%arg0: i32) -> (i32, i32) {
    %c0_i32 = arith.constant 0 : i32
    %c0_i32_0 = arith.constant 0 : i32
    %c0_i32_1 = arith.constant 0 : i32
    return %c0_i32, %c0_i32_0 : i32, i32
  }
  func.func @transform_2(%arg0: i32) -> (i32, i32) {
    %c0_i32 = arith.constant 0 : i32
    %c0_i32_0 = arith.constant 0 : i32
    %c0_i32_1 = arith.constant 0 : i32
    return %c0_i32, %c0_i32_0 : i32, i32
  }
  func.func @transform_3(%arg0: i32) -> (i32, i32) {
    %c0_i32 = arith.constant 0 : i32
    %c0_i32_0 = arith.constant 0 : i32
    return %arg0, %c0_i32 : i32, i32
  }
}

</mosaic_0001>

<llo_original>
// kernel: tpu_custom_call.1
$region0: #{tpu_custom_call.1}
  #allocation0 [shape = 'u32[]', space=smem, size = 0x4, offset = 0x4, fixed_abs, tag = 'smem constant byte address 0x4 - core index']
  #allocation1 [shape = 'u32[144,128]{1,0:T(1,128)}', space=vmem, size = 0x12000, scoped, tag = 'internal scratch']
  %s0 = inlined_call_operand.hbm [shape: f32[4,4], index: 0, kind: input, shape index: {}]
  %s1 = inlined_call_operand.hbm [shape: f32[4,128], index: 1, kind: input, shape index: {}]
  %s2 = inlined_call_operand.vmem [shape: f32[1,128], index: 2, kind: input, shape index: {}]
  %s3 = inlined_call_operand.hbm [shape: f32[4,128], index: 3, kind: output, shape index: {}]
  %s4 = sld [smem:[#allocation0]]
  $region30: #{tpu_custom_call.1} parent=0
    _
  %s6 = ssub.s32 1, %s4
  %s7 = scalar_select 0, %s6, %s4
  $region1: #{tpu_custom_call.1} parent=0
    #allocation2 [shape = 'u8[4096]{0}', space=vmem, size = 0x1000, scoped, tag = 'input window, operand 0, single buffered']
    #allocation3 [shape = 's32[1]{0}', space=sflag, size = 0x4, scoped, tag = 'scoped memory for tpu_custom_call.1']
    #allocation4 [shape = 's32[1]{0}', space=sflag, size = 0x4, scoped, tag = 'scoped memory for tpu_custom_call.1']
    #allocation5 [shape = 'u8[2048]{0}', space=vmem, size = 0x800, scoped, tag = 'input window, operand 1, single buffered']
    #allocation6 [shape = 's32[1]{0}', space=sflag, size = 0x4, scoped, tag = 'scoped memory for tpu_custom_call.1']
    #allocation7 [shape = 'u8[4096]{0}', space=vmem, size = 0x1000, scoped, tag = 'output window, operand 0, single buffered']
    %8 = vsyncpa [#allocation3], 0
    %9 = vsyncpa [#allocation6], 0
    %10 = vsyncpa [#allocation4], 0
    // Predicated region
    $region2: #{tpu_custom_call.1} parent=1 // pred_check
      _
    $region3: #{tpu_custom_call.1} parent=1 // pred_check_branch
      %12 = sbr.rel (0) target = $region5
    $region4: #{tpu_custom_call.1} parent=1 // pred_region
      %s14 = ssub.s32 128, 64
      %15 = vsyncadd [#allocation3], %s14
      %s16 = sshll.u32 [#allocation2], 4
      %s17 = int_to_ptr.vmem [resolvable:$true] %s16
      %22 = dma.hbm_to_vmem [thread:$0]  %s0, 64, %s17, [#allocation3], 64, 64, 4
    $region5: #{tpu_custom_call.1} parent=1 // pred_fallthru
      _
    // Predicated region
    $region6: #{tpu_custom_call.1} parent=1 // pred_check
      _
    $region7: #{tpu_custom_call.1} parent=1 // pred_check_branch
      %24 = sbr.rel (0) target = $region9
    $region8: #{tpu_custom_call.1} parent=1 // pred_region
      %s26 = ssub.s32 64, 64
      %27 = vsyncadd [#allocation6], %s26
      %s29 = sshll.u32 [#allocation5], 4
      %s30 = int_to_ptr.vmem [resolvable:$true] %s29
      %32 = dma.hbm_to_vmem [thread:$0]  %s1, 64, %s30, [#allocation6]
    $region9: #{tpu_custom_call.1} parent=1 // pred_fallthru
      _
    // Predicated region
    $region10: #{tpu_custom_call.1} parent=1 // pred_check
      _
    $region11: #{tpu_custom_call.1} parent=1 // pred_check_branch
      %34 = sbr.rel (0) target = $region13
    $region12: #{tpu_custom_call.1} parent=1 // pred_region
      _
    $region13: #{tpu_custom_call.1} parent=1 // pred_fallthru
      _
    // Predicated region
    $region14: #{tpu_custom_call.1} parent=1 // pred_check
      _
    $region15: #{tpu_custom_call.1} parent=1 // pred_check_branch
      %36 = sbr.rel (0) target = $region17
    $region16: #{tpu_custom_call.1} parent=1 // pred_region
      %37 = dma.done [#allocation3], 128
    $region17: #{tpu_custom_call.1} parent=1 // pred_fallthru
      _
    // Predicated region
    $region18: #{tpu_custom_call.1} parent=1 // pred_check
      _
    $region19: #{tpu_custom_call.1} parent=1 // pred_check_branch
      %39 = sbr.rel (0) target = $region21
    $region20: #{tpu_custom_call.1} parent=1 // pred_region
      %40 = dma.done [#allocation6], 64
    $region21: #{tpu_custom_call.1} parent=1 // pred_fallthru
      _
    %v41 = vld [vmem:[#allocation2] sm:$0xff]
    %v42 = vld [vmem:[#allocation5] sm:$0xf]
    %vm43 = vcmask 31744
    %v45 = vsel %vm43, %v41, 0
    %vm47 = vcmask 1043456
    %v49 = vsel %vm47, %v42, 0
    %51 = vmatprep.subr.mxu0 0.0
    %52 = vmatpush1.msra.mxu0 0.0
    %53 = vmatprep.subr.mxu0 0.0
    %54 = vmatpush1.msra.mxu0 0.0
    %55 = vmatprep.subr.mxu0 0.0
    %56 = vmatpush1.msra.mxu0 0.0
    %57 = vmatprep.subr.mxu0 0.0
    %58 = vmatpush1.msra.mxu0 0.0
    %59 = vmatprep.subr.mxu0 0.0
    %60 = vmatpush1.msra.mxu0 0.0
    %61 = vmatprep.subr.mxu0 0.0
    %62 = vmatpush1.msra.mxu0 0.0
    %63 = vmatprep.subr.mxu0 0.0
    %64 = vmatpush1.msra.mxu0 0.0
    %65 = vmatprep.subr.mxu0 0.0
    %66 = vmatpush1.msra.mxu0 0.0
    %67 = vmatprep.subr.mxu0 0.0
    %68 = vmatpush1.msra.mxu0 0.0
    %69 = vmatprep.subr.mxu0 0.0
    %70 = vmatpush1.msra.mxu0 0.0
    %71 = vmatprep.subr.mxu0 0.0
    %72 = vmatpush1.msra.mxu0 0.0
    %73 = vmatprep.subr.mxu0 0.0
    %74 = vmatpush1.msra.mxu0 0.0
    %75 = vmatprep.subr.mxu0 0.0
    %76 = vmatpush1.msra.mxu0 0.0
    %77 = vmatprep.subr.mxu0 0.0
    %78 = vmatpush1.msra.mxu0 0.0
    %79 = vmatprep.subr.mxu0 0.0
    %80 = vmatpush1.msra.mxu0 0.0
    %81 = vmatprep.subr.mxu0 0.0
    %v82 = vand.u32 %v49, 4294901760
    %83 = vmatpush1.msra.mxu0 %v82
    %84 = vmatprep.subr.mxu0 0.0
    %85 = vmatpush2.msra.mxu0 0.0
    %86 = vmatprep.subr.mxu0 0.0
    %87 = vmatpush2.msra.mxu0 0.0
    %88 = vmatprep.subr.mxu0 0.0
    %89 = vmatpush2.msra.mxu0 0.0
    %90 = vmatprep.subr.mxu0 0.0
    %91 = vmatpush2.msra.mxu0 0.0
    %92 = vmatprep.subr.mxu0 0.0
    %93 = vmatpush2.msra.mxu0 0.0
    %94 = vmatprep.subr.mxu0 0.0
    %95 = vmatpush2.msra.mxu0 0.0
    %96 = vmatprep.subr.mxu0 0.0
    %97 = vmatpush2.msra.mxu0 0.0
    %98 = vmatprep.subr.mxu0 0.0
    %99 = vmatpush2.msra.mxu0 0.0
    %100 = vmatprep.subr.mxu0 0.0
    %101 = vmatpush2.msra.mxu0 0.0
    %102 = vmatprep.subr.mxu0 0.0
    %103 = vmatpush2.msra.mxu0 0.0
    %104 = vmatprep.subr.mxu0 0.0
    %105 = vmatpush2.msra.mxu0 0.0
    %106 = vmatprep.subr.mxu0 0.0
    %107 = vmatpush2.msra.mxu0 0.0
    %108 = vmatprep.subr.mxu0 0.0
    %109 = vmatpush2.msra.mxu0 0.0
    %110 = vmatprep.subr.mxu0 0.0
    %111 = vmatpush2.msra.mxu0 0.0
    %112 = vmatprep.subr.mxu0 0.0
    %113 = vmatpush2.msra.mxu0 0.0
    %114 = vmatprep.subr.mxu0 0.0
    %115 = vmatpush2.msra.mxu0 0.0
    %116 = vmatprep.mubr.f32.mxu0 0.0
    %v117 = vand.u32 %v45, 4294901760
    %v118 = vsub.f32 %v45, %v117
    %v119 = vand.u32 %v118, 4294901760
    %v120 = vsub.f32 %v118, %v119
    %v121 = vand.u32 %v120, 4294901760
    %122 = vmatmul.mubr.f32.gmra.mxu0 %v121
    %v123 = vpop.f32.mrf.mxu0
    %v124 = vadd.f32 0.0, %v123
    %v125 = vpop.f32.mrf.mxu0
    %126 = vdwg.mxu0
    %127 = vmatprep.subr.mxu0 0.0
    %128 = vmatpush1.msra.mxu0 0.0
    %129 = vmatprep.subr.mxu0 0.0
    %130 = vmatpush1.msra.mxu0 0.0
    %131 = vmatprep.subr.mxu0 0.0
    %132 = vmatpush1.msra.mxu0 0.0
    %133 = vmatprep.subr.mxu0 0.0
    %134 = vmatpush1.msra.mxu0 0.0
    %135 = vmatprep.subr.mxu0 0.0
    %136 = vmatpush1.msra.mxu0 0.0
    %137 = vmatprep.subr.mxu0 0.0
    %138 = vmatpush1.msra.mxu0 0.0
    %139 = vmatprep.subr.mxu0 0.0
    %140 = vmatpush1.msra.mxu0 0.0
    %141 = vmatprep.subr.mxu0 0.0
    %142 = vmatpush1.msra.mxu0 0.0
    %143 = vmatprep.subr.mxu0 0.0
    %144 = vmatpush1.msra.mxu0 0.0
    %145 = vmatprep.subr.mxu0 0.0
    %146 = vmatpush1.msra.mxu0 0.0
    %147 = vmatprep.subr.mxu0 0.0
    %148 = vmatpush1.msra.mxu0 0.0
    %149 = vmatprep.subr.mxu0 0.0
    %150 = vmatpush1.msra.mxu0 0.0
    %151 = vmatprep.subr.mxu0 0.0
    %152 = vmatpush1.msra.mxu0 0.0
    %153 = vmatprep.subr.mxu0 0.0
    %154 = vmatpush1.msra.mxu0 0.0
    %155 = vmatprep.subr.mxu0 0.0
    %156 = vmatpush1.msra.mxu0 0.0
    %157 = vmatprep.subr.mxu0 0.0
    %v158 = vand.u32 %v49, 4294901760
    %v159 = vsub.f32 %v49, %v158
    %v160 = vand.u32 %v159, 4294901760
    %v161 = vsub.f32 %v159, %v160
    %v162 = vand.u32 %v161, 4294901760
    %163 = vmatpush1.msra.mxu0 %v162
    %164 = vmatprep.subr.mxu0 0.0
    %165 = vmatpush2.msra.mxu0 0.0
    %166 = vmatprep.subr.mxu0 0.0
    %167 = vmatpush2.msra.mxu0 0.0
    %168 = vmatprep.subr.mxu0 0.0
    %169 = vmatpush2.msra.mxu0 0.0
    %170 = vmatprep.subr.mxu0 0.0
    %171 = vmatpush2.msra.mxu0 0.0
    %172 = vmatprep.subr.mxu0 0.0
    %173 = vmatpush2.msra.mxu0 0.0
    %174 = vmatprep.subr.mxu0 0.0
    %175 = vmatpush2.msra.mxu0 0.0
    %176 = vmatprep.subr.mxu0 0.0
    %177 = vmatpush2.msra.mxu0 0.0
    %178 = vmatprep.subr.mxu0 0.0
    %179 = vmatpush2.msra.mxu0 0.0
    %180 = vmatprep.subr.mxu0 0.0
    %181 = vmatpush2.msra.mxu0 0.0
    %182 = vmatprep.subr.mxu0 0.0
    %183 = vmatpush2.msra.mxu0 0.0
    %184 = vmatprep.subr.mxu0 0.0
    %185 = vmatpush2.msra.mxu0 0.0
    %186 = vmatprep.subr.mxu0 0.0
    %187 = vmatpush2.msra.mxu0 0.0
    %188 = vmatprep.subr.mxu0 0.0
    %189 = vmatpush2.msra.mxu0 0.0
    %190 = vmatprep.subr.mxu0 0.0
    %191 = vmatpush2.msra.mxu0 0.0
    %192 = vmatprep.subr.mxu0 0.0
    %193 = vmatpush2.msra.mxu0 0.0
    %194 = vmatprep.subr.mxu0 0.0
    %195 = vmatpush2.msra.mxu0 0.0
    %196 = vmatprep.mubr.f32.mxu0 0.0
    %v197 = vand.u32 %v45, 4294901760
    %198 = vmatmul.mubr.f32.gmra.mxu0 %v197
    %v199 = vpop.f32.mrf.mxu0
    %v200 = vadd.f32 %v124, %v199
    %v201 = vpop.f32.mrf.mxu0
    %202 = vdwg.mxu0
    %203 = vmatprep.subr.mxu0 0.0
    %204 = vmatpush1.msra.mxu0 0.0
    %205 = vmatprep.subr.mxu0 0.0
    %206 = vmatpush1.msra.mxu0 0.0
    %207 = vmatprep.subr.mxu0 0.0
    %208 = vmatpush1.msra.mxu0 0.0
    %209 = vmatprep.subr.mxu0 0.0
    %210 = vmatpush1.msra.mxu0 0.0
    %211 = vmatprep.subr.mxu0 0.0
    %212 = vmatpush1.msra.mxu0 0.0
    %213 = vmatprep.subr.mxu0 0.0
    %214 = vmatpush1.msra.mxu0 0.0
    %215 = vmatprep.subr.mxu0 0.0
    %216 = vmatpush1.msra.mxu0 0.0
    %217 = vmatprep.subr.mxu0 0.0
    %218 = vmatpush1.msra.mxu0 0.0
    %219 = vmatprep.subr.mxu0 0.0
    %220 = vmatpush1.msra.mxu0 0.0
    %221 = vmatprep.subr.mxu0 0.0
    %222 = vmatpush1.msra.mxu0 0.0
    %223 = vmatprep.subr.mxu0 0.0
    %224 = vmatpush1.msra.mxu0 0.0
    %225 = vmatprep.subr.mxu0 0.0
    %226 = vmatpush1.msra.mxu0 0.0
    %227 = vmatprep.subr.mxu0 0.0
    %228 = vmatpush1.msra.mxu0 0.0
    %229 = vmatprep.subr.mxu0 0.0
    %230 = vmatpush1.msra.mxu0 0.0
    %231 = vmatprep.subr.mxu0 0.0
    %232 = vmatpush1.msra.mxu0 0.0
    %233 = vmatprep.subr.mxu0 0.0
    %v234 = vand.u32 %v49, 4294901760
    %v235 = vsub.f32 %v49, %v234
    %236 = vmatpush1.msra.mxu0 %v235
    %237 = vmatprep.subr.mxu0 0.0
    %238 = vmatpush2.msra.mxu0 0.0
    %239 = vmatprep.subr.mxu0 0.0
    %240 = vmatpush2.msra.mxu0 0.0
    %241 = vmatprep.subr.mxu0 0.0
    %242 = vmatpush2.msra.mxu0 0.0
    %243 = vmatprep.subr.mxu0 0.0
    %244 = vmatpush2.msra.mxu0 0.0
    %245 = vmatprep.subr.mxu0 0.0
    %246 = vmatpush2.msra.mxu0 0.0
    %247 = vmatprep.subr.mxu0 0.0
    %248 = vmatpush2.msra.mxu0 0.0
    %249 = vmatprep.subr.mxu0 0.0
    %250 = vmatpush2.msra.mxu0 0.0
    %251 = vmatprep.subr.mxu0 0.0
    %252 = vmatpush2.msra.mxu0 0.0
    %253 = vmatprep.subr.mxu0 0.0
    %254 = vmatpush2.msra.mxu0 0.0
    %255 = vmatprep.subr.mxu0 0.0
    %256 = vmatpush2.msra.mxu0 0.0
    %257 = vmatprep.subr.mxu0 0.0
    %258 = vmatpush2.msra.mxu0 0.0
    %259 = vmatprep.subr.mxu0 0.0
    %260 = vmatpush2.msra.mxu0 0.0
    %261 = vmatprep.subr.mxu0 0.0
    %262 = vmatpush2.msra.mxu0 0.0
    %263 = vmatprep.subr.mxu0 0.0
    %264 = vmatpush2.msra.mxu0 0.0
    %265 = vmatprep.subr.mxu0 0.0
    %266 = vmatpush2.msra.mxu0 0.0
    %267 = vmatprep.subr.mxu0 0.0
    %268 = vmatpush2.msra.mxu0 0.0
    %269 = vmatprep.mubr.f32.mxu0 0.0
    %v270 = vand.u32 %v45, 4294901760
    %v271 = vsub.f32 %v45, %v270
    %272 = vmatmul.mubr.f32.gmra.mxu0 %v271
    %v273 = vpop.f32.mrf.mxu0
    %v274 = vadd.f32 %v200, %v273
    %v275 = vpop.f32.mrf.mxu0
    %276 = vdwg.mxu0
    %277 = vmatprep.subr.mxu0 0.0
    %278 = vmatpush1.msra.mxu0 0.0
    %279 = vmatprep.subr.mxu0 0.0
    %280 = vmatpush1.msra.mxu0 0.0
    %281 = vmatprep.subr.mxu0 0.0
    %282 = vmatpush1.msra.mxu0 0.0
    %283 = vmatprep.subr.mxu0 0.0
    %284 = vmatpush1.msra.mxu0 0.0
    %285 = vmatprep.subr.mxu0 0.0
    %286 = vmatpush1.msra.mxu0 0.0
    %287 = vmatprep.subr.mxu0 0.0
    %288 = vmatpush1.msra.mxu0 0.0
    %289 = vmatprep.subr.mxu0 0.0
    %290 = vmatpush1.msra.mxu0 0.0
    %291 = vmatprep.subr.mxu0 0.0
    %292 = vmatpush1.msra.mxu0 0.0
    %293 = vmatprep.subr.mxu0 0.0
    %294 = vmatpush1.msra.mxu0 0.0
    %295 = vmatprep.subr.mxu0 0.0
    %296 = vmatpush1.msra.mxu0 0.0
    %297 = vmatprep.subr.mxu0 0.0
    %298 = vmatpush1.msra.mxu0 0.0
    %299 = vmatprep.subr.mxu0 0.0
    %300 = vmatpush1.msra.mxu0 0.0
    %301 = vmatprep.subr.mxu0 0.0
    %302 = vmatpush1.msra.mxu0 0.0
    %303 = vmatprep.subr.mxu0 0.0
    %304 = vmatpush1.msra.mxu0 0.0
    %305 = vmatprep.subr.mxu0 0.0
    %306 = vmatpush1.msra.mxu0 0.0
    %307 = vmatprep.subr.mxu0 0.0
    %v308 = vand.u32 %v49, 4294901760
    %309 = vmatpush1.msra.mxu0 %v308
    %310 = vmatprep.subr.mxu0 0.0
    %311 = vmatpush2.msra.mxu0 0.0
    %312 = vmatprep.subr.mxu0 0.0
    %313 = vmatpush2.msra.mxu0 0.0
    %314 = vmatprep.subr.mxu0 0.0
    %315 = vmatpush2.msra.mxu0 0.0
    %316 = vmatprep.subr.mxu0 0.0
    %317 = vmatpush2.msra.mxu0 0.0
    %318 = vmatprep.subr.mxu0 0.0
    %319 = vmatpush2.msra.mxu0 0.0
    %320 = vmatprep.subr.mxu0 0.0
    %321 = vmatpush2.msra.mxu0 0.0
    %322 = vmatprep.subr.mxu0 0.0
    %323 = vmatpush2.msra.mxu0 0.0
    %324 = vmatprep.subr.mxu0 0.0
    %325 = vmatpush2.msra.mxu0 0.0
    %326 = vmatprep.subr.mxu0 0.0
    %327 = vmatpush2.msra.mxu0 0.0
    %328 = vmatprep.subr.mxu0 0.0
    %329 = vmatpush2.msra.mxu0 0.0
    %330 = vmatprep.subr.mxu0 0.0
    %331 = vmatpush2.msra.mxu0 0.0
    %332 = vmatprep.subr.mxu0 0.0
    %333 = vmatpush2.msra.mxu0 0.0
    %334 = vmatprep.subr.mxu0 0.0
    %335 = vmatpush2.msra.mxu0 0.0
    %336 = vmatprep.subr.mxu0 0.0
    %337 = vmatpush2.msra.mxu0 0.0
    %338 = vmatprep.subr.mxu0 0.0
    %339 = vmatpush2.msra.mxu0 0.0
    %340 = vmatprep.subr.mxu0 0.0
    %341 = vmatpush2.msra.mxu0 0.0
    %342 = vmatprep.mubr.f32.mxu0 0.0
    %v343 = vand.u32 %v45, 4294901760
    %v344 = vsub.f32 %v45, %v343
    %v345 = vand.u32 %v344, 4294901760
    %346 = vmatmul.mubr.f32.gmra.mxu0 %v345
    %v347 = vpop.f32.mrf.mxu0
    %v348 = vadd.f32 %v274, %v347
    %v349 = vpop.f32.mrf.mxu0
    %350 = vdwg.mxu0
    %351 = vmatprep.subr.mxu0 0.0
    %352 = vmatpush1.msra.mxu0 0.0
    %353 = vmatprep.subr.mxu0 0.0
    %354 = vmatpush1.msra.mxu0 0.0
    %355 = vmatprep.subr.mxu0 0.0
    %356 = vmatpush1.msra.mxu0 0.0
    %357 = vmatprep.subr.mxu0 0.0
    %358 = vmatpush1.msra.mxu0 0.0
    %359 = vmatprep.subr.mxu0 0.0
    %360 = vmatpush1.msra.mxu0 0.0
    %361 = vmatprep.subr.mxu0 0.0
    %362 = vmatpush1.msra.mxu0 0.0
    %363 = vmatprep.subr.mxu0 0.0
    %364 = vmatpush1.msra.mxu0 0.0
    %365 = vmatprep.subr.mxu0 0.0
    %366 = vmatpush1.msra.mxu0 0.0
    %367 = vmatprep.subr.mxu0 0.0
    %368 = vmatpush1.msra.mxu0 0.0
    %369 = vmatprep.subr.mxu0 0.0
    %370 = vmatpush1.msra.mxu0 0.0
    %371 = vmatprep.subr.mxu0 0.0
    %372 = vmatpush1.msra.mxu0 0.0
    %373 = vmatprep.subr.mxu0 0.0
    %374 = vmatpush1.msra.mxu0 0.0
    %375 = vmatprep.subr.mxu0 0.0
    %376 = vmatpush1.msra.mxu0 0.0
    %377 = vmatprep.subr.mxu0 0.0
    %378 = vmatpush1.msra.mxu0 0.0
    %379 = vmatprep.subr.mxu0 0.0
    %380 = vmatpush1.msra.mxu0 0.0
    %381 = vmatprep.subr.mxu0 0.0
    %v382 = vand.u32 %v49, 4294901760
    %v383 = vsub.f32 %v49, %v382
    %v384 = vand.u32 %v383, 4294901760
    %385 = vmatpush1.msra.mxu0 %v384
    %386 = vmatprep.subr.mxu0 0.0
    %387 = vmatpush2.msra.mxu0 0.0
    %388 = vmatprep.subr.mxu0 0.0
    %389 = vmatpush2.msra.mxu0 0.0
    %390 = vmatprep.subr.mxu0 0.0
    %391 = vmatpush2.msra.mxu0 0.0
    %392 = vmatprep.subr.mxu0 0.0
    %393 = vmatpush2.msra.mxu0 0.0
    %394 = vmatprep.subr.mxu0 0.0
    %395 = vmatpush2.msra.mxu0 0.0
    %396 = vmatprep.subr.mxu0 0.0
    %397 = vmatpush2.msra.mxu0 0.0
    %398 = vmatprep.subr.mxu0 0.0
    %399 = vmatpush2.msra.mxu0 0.0
    %400 = vmatprep.subr.mxu0 0.0
    %401 = vmatpush2.msra.mxu0 0.0
    %402 = vmatprep.subr.mxu0 0.0
    %403 = vmatpush2.msra.mxu0 0.0
    %404 = vmatprep.subr.mxu0 0.0
    %405 = vmatpush2.msra.mxu0 0.0
    %406 = vmatprep.subr.mxu0 0.0
    %407 = vmatpush2.msra.mxu0 0.0
    %408 = vmatprep.subr.mxu0 0.0
    %409 = vmatpush2.msra.mxu0 0.0
    %410 = vmatprep.subr.mxu0 0.0
    %411 = vmatpush2.msra.mxu0 0.0
    %412 = vmatprep.subr.mxu0 0.0
    %413 = vmatpush2.msra.mxu0 0.0
    %414 = vmatprep.subr.mxu0 0.0
    %415 = vmatpush2.msra.mxu0 0.0
    %416 = vmatprep.subr.mxu0 0.0
    %417 = vmatpush2.msra.mxu0 0.0
    %418 = vmatprep.mubr.f32.mxu0 0.0
    %v419 = vand.u32 %v45, 4294901760
    %420 = vmatmul.mubr.f32.gmra.mxu0 %v419
    %v421 = vpop.f32.mrf.mxu0
    %v422 = vadd.f32 %v348, %v421
    %v423 = vpop.f32.mrf.mxu0
    %424 = vdwg.mxu0
    %425 = vmatprep.subr.mxu0 0.0
    %426 = vmatpush1.msra.mxu0 0.0
    %427 = vmatprep.subr.mxu0 0.0
    %428 = vmatpush1.msra.mxu0 0.0
    %429 = vmatprep.subr.mxu0 0.0
    %430 = vmatpush1.msra.mxu0 0.0
    %431 = vmatprep.subr.mxu0 0.0
    %432 = vmatpush1.msra.mxu0 0.0
    %433 = vmatprep.subr.mxu0 0.0
    %434 = vmatpush1.msra.mxu0 0.0
    %435 = vmatprep.subr.mxu0 0.0
    %436 = vmatpush1.msra.mxu0 0.0
    %437 = vmatprep.subr.mxu0 0.0
    %438 = vmatpush1.msra.mxu0 0.0
    %439 = vmatprep.subr.mxu0 0.0
    %440 = vmatpush1.msra.mxu0 0.0
    %441 = vmatprep.subr.mxu0 0.0
    %442 = vmatpush1.msra.mxu0 0.0
    %443 = vmatprep.subr.mxu0 0.0
    %444 = vmatpush1.msra.mxu0 0.0
    %445 = vmatprep.subr.mxu0 0.0
    %446 = vmatpush1.msra.mxu0 0.0
    %447 = vmatprep.subr.mxu0 0.0
    %448 = vmatpush1.msra.mxu0 0.0
    %449 = vmatprep.subr.mxu0 0.0
    %450 = vmatpush1.msra.mxu0 0.0
    %451 = vmatprep.subr.mxu0 0.0
    %452 = vmatpush1.msra.mxu0 0.0
    %453 = vmatprep.subr.mxu0 0.0
    %454 = vmatpush1.msra.mxu0 0.0
    %455 = vmatprep.subr.mxu0 0.0
    %v456 = vand.u32 %v49, 4294901760
    %457 = vmatpush1.msra.mxu0 %v456
    %458 = vmatprep.subr.mxu0 0.0
    %459 = vmatpush2.msra.mxu0 0.0
    %460 = vmatprep.subr.mxu0 0.0
    %461 = vmatpush2.msra.mxu0 0.0
    %462 = vmatprep.subr.mxu0 0.0
    %463 = vmatpush2.msra.mxu0 0.0
    %464 = vmatprep.subr.mxu0 0.0
    %465 = vmatpush2.msra.mxu0 0.0
    %466 = vmatprep.subr.mxu0 0.0
    %467 = vmatpush2.msra.mxu0 0.0
    %468 = vmatprep.subr.mxu0 0.0
    %469 = vmatpush2.msra.mxu0 0.0
    %470 = vmatprep.subr.mxu0 0.0
    %471 = vmatpush2.msra.mxu0 0.0
    %472 = vmatprep.subr.mxu0 0.0
    %473 = vmatpush2.msra.mxu0 0.0
    %474 = vmatprep.subr.mxu0 0.0
    %475 = vmatpush2.msra.mxu0 0.0
    %476 = vmatprep.subr.mxu0 0.0
    %477 = vmatpush2.msra.mxu0 0.0
    %478 = vmatprep.subr.mxu0 0.0
    %479 = vmatpush2.msra.mxu0 0.0
    %480 = vmatprep.subr.mxu0 0.0
    %481 = vmatpush2.msra.mxu0 0.0
    %482 = vmatprep.subr.mxu0 0.0
    %483 = vmatpush2.msra.mxu0 0.0
    %484 = vmatprep.subr.mxu0 0.0
    %485 = vmatpush2.msra.mxu0 0.0
    %486 = vmatprep.subr.mxu0 0.0
    %487 = vmatpush2.msra.mxu0 0.0
    %488 = vmatprep.subr.mxu0 0.0
    %489 = vmatpush2.msra.mxu0 0.0
    %490 = vmatprep.mubr.f32.mxu0 0.0
    %v491 = vand.u32 %v45, 4294901760
    %492 = vmatmul.mubr.f32.gmra.mxu0 %v491
    %v493 = vpop.f32.mrf.mxu0
    %v494 = vadd.f32 %v422, %v493
    %v495 = vpop.f32.mrf.mxu0
    %496 = vdwg.mxu0
    %v497 = vld [vmem:[%s2] sm:$0x1]
    %v499 = vlaneseq
    %v500 = vshrl.u32 %v499, 7
    %v501 = vsub.s32 0, %v500
    %v502 = vrot.slane %v497, %v501
    %v504 = vadd.f32 %v502, %v494
    %v505 = vand.u32 2147483647, %v504
    %vm506 = vcmp.le.f32.partialorder %v505, 0.7853982
    %vm507 = vcmp.lt.s32.totalorder %v504, 0
    %v508 = vand.u32 %v504, 2139095040
    %v509 = vshrl.u32 %v508, 23
    %v510 = vsub.s32 %v509, 127
    %v511 = vand.u32 2147483647, %v504
    %v512 = vand.u32 %v511, 8388607
    %v513 = vor.u32 %v512, 8388608
    %v514 = vsub.s32 0, %v513
    %v515 = vadd.s32 %v510, 1
    %vm516 = vcmp.gt.s32.totalorder %v515, 0
    %v517 = vsel %vm516, %v515, 0
    %v518 = vshrl.u32 %v517, 5
    %v519 = vand.u32 %v517, 31
    %v520 = vsub.s32 32, %v519
    %v521 = vshrl.u32 683565275, %v520
    %v522 = vshll.u32 683565275, %v519
    %v523 = vshrl.u32 2475754826, %v520
    %v524 = vor.u32 %v522, %v523
    %v525 = vshll.u32 2475754826, %v519
    %v526 = vshrl.u32 2131351028, %v520
    %v527 = vor.u32 %v525, %v526
    %v528 = vshll.u32 2131351028, %v519
    %v529 = vshrl.u32 2102212464, %v520
    %v530 = vor.u32 %v528, %v529
    %v531 = vshll.u32 2102212464, %v519
    %v532 = vshrl.u32 920167782, %v520
    %v533 = vor.u32 %v531, %v532
    %v534 = vshll.u32 920167782, %v519
    %v535 = vshrl.u32 1326507024, %v520
    %v536 = vor.u32 %v534, %v535
    %vm537 = vcmp.lt.s32.totalorder %v518, 1
    %vm538 = vcmp.lt.s32.totalorder %v518, 2
    %vm539 = vcmp.lt.s32.totalorder %v518, 3
    %vm540 = vcmp.lt.s32.totalorder %v518, 4
    %v541 = vsel %vm537, %v521, %v524
    %v542 = vsel %vm540, %v530, 2102212464
    %v543 = vsel %vm539, %v527, %v542
    %v544 = vsel %vm538, %v541, %v543
    %v545 = vsel %vm537, %v524, %v527
    %v546 = vsel %vm540, %v533, 920167782
    %v547 = vsel %vm539, %v530, %v546
    %v548 = vsel %vm538, %v545, %v547
    %v549 = vsel %vm537, %v527, %v530
    %v550 = vsel %vm540, %v536, 1326507024
    %v551 = vsel %vm539, %v533, %v550
    %v552 = vsel %vm538, %v549, %v551
    %v553 = vshll.u32 %v513, 8
    %v554 = vmul.u32.u64.compose %v553, %v552
    %v555 = vextract.low.u32 %v554
    %v556 = vextract.high.u32 %v554
    %v557 = vmul.u32.u64.compose %v553, %v548
    %v558 = vextract.low.u32 %v557
    %v559 = vextract.high.u32 %v557
    %v560 = vmul.u32 %v553, %v544
    %v561 = vadd.s32 %v556, %v558
    %vm562 = vc.u32 %v556, %v558
    %v563 = vadd.s32 %v559, 1
    %v564 = vsel %vm562, %v563, %v559
    %v565 = vadd.s32 %v560, %v564
    %v566 = vadd.s32 %v565, 536870912
    %v567 = vshrl.u32 %v566, 30
    %v568 = vshll.u32 %v567, 30
    %v569 = vsub.s32 %v565, %v568
    %vm570 = vcmp.lt.s32.totalorder %v569, 0
    %v571 = vsub.s32 0, %v569
    %v572 = vsel %vm570, %v571, %v569
    %v573 = vclz %v572
    %v574 = vsub.s32 %v573, 2
    %vm575 = vcmp.gt.s32.totalorder 0, %v574
    %v576 = vsel %vm575, 0, %v574
    %v577 = vsub.s32 32, %v576
    %v578 = vshll.u32 %v569, %v576
    %v579 = vshrl.u32 %v561, %v577
    %v580 = vor.u32 %v578, %v579
    %v581 = vsub.s32 4294967266, %v576
    %v582 = vadd.s32 %v581, 127
    %v583 = vshll.u32 %v582, 23
    %v584 = vor.u32 4788187, %v583
    %v585 = vand.u32 2147483647, %v584
    %v587 = vcvt.s32.f32 %v580
    %v588 = vmul.f32 %v587, %v585
    %v589 = vxor.u32 %v588, 2147483648
    %v590 = vsel %vm507, %v589, %v588
    %v591 = vsub.s32 4, %v567
    %v592 = vsel %vm507, %v591, %v567
    %v593 = vsel %vm506, %v504, %v590
    %v594 = vsel %vm506, 0, %v592
    %v595 = vcosq.f32.pop %v593
    %v596 = vsinq.f32.pop %v593
    %vm597 = vweird.f32 %v504
    %v598 = vadd.s32 %v594, 3
    %v599 = vand.u32 %v598, 3
    %vm600 = vcmp.lt.s32.totalorder %v599, 2
    %vm601 = vcmp.eq.s32.totalorder %v599, 0
    %v602 = vxor.u32 %v596, 2147483648
    %v603 = vsel %vm601, %v595, %v602
    %vm604 = vcmp.eq.s32.totalorder %v599, 2
    %v605 = vxor.u32 %v595, 2147483648
    %v606 = vsel %vm604, %v605, %v596
    %v607 = vsel %vm600, %v603, %v606
    %v608 = vsel %vm597, nan, %v607
    %609 = vst [vmem:[#allocation7] sm:$0xff] %v608
    // Predicated region
    $region22: #{tpu_custom_call.1} parent=1 // pred_check
      _
    $region23: #{tpu_custom_call.1} parent=1 // pred_check_branch
      %611 = sbr.rel (0) target = $region25
    $region24: #{tpu_custom_call.1} parent=1 // pred_region
      %s613 = ssub.s32 128, 64
      %614 = vsyncadd [#allocation4], %s613
      %s615 = sshll.u32 [#allocation7], 4
      %s616 = int_to_ptr.vmem [resolvable:$true] %s615
      %621 = dma.vmem_to_hbm [thread:$0]  %s616, 64, %s3, [#allocation4], 64, 64, 4
    $region25: #{tpu_custom_call.1} parent=1 // pred_fallthru
      _
    // Predicated region
    $region26: #{tpu_custom_call.1} parent=1 // pred_check
      _
    $region27: #{tpu_custom_call.1} parent=1 // pred_check_branch
      %623 = sbr.rel (0) target = $region29
    $region28: #{tpu_custom_call.1} parent=1 // pred_region
      %624 = dma.done [#allocation4], 128
    $region29: #{tpu_custom_call.1} parent=1 // pred_fallthru
      _
    %625 = vsyncpa [#allocation3], 1
    %626 = vsyncpa [#allocation6], 1
    %627 = vsyncpa [#allocation4], 1

</llo_original>
